<compile_context>
chip_gen: v7x
topology: tpu7x:2x2x1
jax: 0.10.0
libtpu: 0.0.40
codegen_flags: <defaults>
</compile_context>

<pallas_src>
import jax
import jax.numpy as jnp
from jax.experimental import pallas as pl
from jax.experimental.pallas import tpu as pltpu

POOL = 4             # F.avg_pool2d(x, 4)
LANE = 128           # TPU lane width
SUBLANE = 8          # TPU sublane width
FOLD_MAX_NPAD = 256  # fold the pool into the weight only while the matmul is mem-bound

VMEM_TILE_BUDGET = 24 * 1024 * 1024   # bytes for data tiles (safe on v5e/v6e/v7x)
VMEM_LIMIT_BYTES = 32 * 1024 * 1024   # scoped VMEM limit (raises v5e's 16 MiB default)


def _round_up(v, m):
    return ((v + m - 1) // m) * m


def _linear_kernel(x_ref, w_ref, b_ref, o_ref):
    # x_ref: [tb, K]     activation tile, native dtype (f32 or bf16)
    # w_ref: [K, n_pad]  bf16 weight, resident (single-buffered)
    # b_ref: [1, n_pad]  f32 bias, resident (single-buffered)
    # o_ref: [tb, n_pad] f32 output tile
    x = x_ref[...].astype(jnp.bfloat16)  # explicit cast -> bf16 MXU matmul, f32 accum
    o_ref[...] = (
        jnp.dot(x, w_ref[...], preferred_element_type=jnp.float32) + b_ref[...]
    )


def _linear_pallas(x2d, w2d, b2, *, max_tb=512):
    """out[b, :] = x2d[b, :] @ w2d + b2   (batch-tiled, lane-dense MXU matmul)."""
    B, K = x2d.shape
    Kw, n_pad = w2d.shape
    assert Kw == K and n_pad % LANE == 0

    # ---- Pick the batch tile size. ----
    itemsize = x2d.dtype.itemsize
    fixed = K * n_pad * 2 + n_pad * 4               # single-buffered bf16 weight + bias
    per_row = 2 * K * itemsize + 2 * n_pad * 4      # double-buffered x tile + out tile
    tb_fit = max(SUBLANE, ((VMEM_TILE_BUDGET - fixed) // per_row) // SUBLANE * SUBLANE)
    b8 = _round_up(B, SUBLANE)
    tb_split = max(SUBLANE, _round_up((b8 + 1) // 2, SUBLANE))  # >=2 steps -> both v7x TCs
    tb = max(SUBLANE, min(max_tb, b8, tb_fit, tb_split))

    return pl.pallas_call(
        _linear_kernel,
        out_shape=jax.ShapeDtypeStruct((B, n_pad), jnp.float32),
        grid=(pl.cdiv(B, tb),),
        in_specs=[
            pl.BlockSpec((tb, K), lambda i: (i, 0)),                   # activation tile
            pl.BlockSpec((K, n_pad), lambda i: (0, 0),
                         pipeline_mode=pl.Buffered(1)),                # resident weight
            pl.BlockSpec((1, n_pad), lambda i: (0, 0),
                         pipeline_mode=pl.Buffered(1)),                # resident bias
        ],
        out_specs=pl.BlockSpec((tb, n_pad), lambda i: (i, 0)),
        compiler_params=pltpu.CompilerParams(
            dimension_semantics=("parallel",),
            vmem_limit_bytes=VMEM_LIMIT_BYTES,
        ),
    )(x2d, w2d, b2)


def prepare_resnet18_last_params(weight, bias, C, H, W):
    """One-time parameter prep (call at load time, NOT per forward).

    weight: [num_classes, C*(H//4)*(W//4)], bias: [num_classes]
    """
    num_classes, F_ = weight.shape
    assert H % POOL == 0 and W % POOL == 0
    Ho, Wo = H // POOL, W // POOL
    assert F_ == C * Ho * Wo, "linear in_features must match pooled+flattened size"
    n_pad = _round_up(num_classes, LANE)
    fold = n_pad <= FOLD_MAX_NPAD

    if fold:
        # Fold avg_pool2d(4) into the weight, built small-matrix-first:
        # transpose the tiny [N, F] weight, then broadcast along the pooled axes.
        K = C * H * W
        wt = (weight.astype(jnp.float32) / float(POOL * POOL)).T        # [F, N] (small)
        wt = wt.reshape(C, Ho, 1, Wo, 1, num_classes)
        w2d = jnp.broadcast_to(
            wt, (C, Ho, POOL, Wo, POOL, num_classes)
        ).reshape(K, num_classes)                                       # [K, N]
    else:
        # Large head (compute-bound regime): keep the small un-folded weight;
        # the forward pre-pools the activation instead.
        w2d = weight.astype(jnp.float32).T                              # [F, N]

    w2d = jnp.pad(w2d, ((0, 0), (0, n_pad - num_classes))).astype(jnp.bfloat16)
    b2 = jnp.pad(bias.astype(jnp.float32), (0, n_pad - num_classes)).reshape(1, n_pad)
    return {"w": w2d, "b": b2, "num_classes": num_classes, "fold": fold}


def resnet18_last(x, params, *, max_tb=512):
    """Forward of ResNet18_last: avg_pool2d(x, 4) -> flatten -> linear."""
    B, C, H, W = x.shape
    if params["fold"]:
        x2d = x.reshape(B, C * H * W)        # free contiguous reshape, native dtype
    else:
        x2d = jnp.mean(
            x.reshape(B, C, H // POOL, POOL, W // POOL, POOL), axis=(3, 5)
        ).reshape(B, -1)
    out = _linear_pallas(x2d, params["w"], params["b"], max_tb=max_tb)
    return out[:, : params["num_classes"]]


if __name__ == "__main__":
    key = jax.random.PRNGKey(0)
    B, C, H, W, NUM_CLASSES = 2, 4, 16, 16, 10
    kx, kw, kb = jax.random.split(key, 3)

    x = jax.random.normal(kx, (B, C, H, W), dtype=jnp.float32)

    in_features = C * (H // POOL) * (W // POOL)
    # Deterministic init mimicking nn.Linear's default uniform(-1/sqrt(fan_in), 1/sqrt(fan_in)).
    bound = 1.0 / (in_features ** 0.5)
    weight = jax.random.uniform(
        kw, (NUM_CLASSES, in_features), minval=-bound, maxval=bound, dtype=jnp.float32
    )
    bias = jax.random.uniform(
        kb, (NUM_CLASSES,), minval=-bound, maxval=bound, dtype=jnp.float32
    )

    # One-time parameter prep (hoisted out of the per-forward path).
    params = prepare_resnet18_last_params(weight, bias, C, H, W)
    out = jax.block_until_ready(resnet18_last(x, params))

    # Pure-JAX reference of the exact PyTorch forward (f32).
    pooled_ref = jnp.mean(
        x.reshape(B, C, H // POOL, POOL, W // POOL, POOL), axis=(3, 5)
    ).reshape(B, -1)
    ref = pooled_ref @ weight.T + bias
    assert out.shape == (B, NUM_CLASSES)
    # bf16 MXU inputs with f32 accumulation -> slightly looser tolerance.
    assert jnp.allclose(out, ref, atol=5e-2, rtol=5e-2), "mismatch vs reference"

    print("KERNEL_OK")
</pallas_src>

<mosaic_0001>
module attributes {stable_mosaic.version = 11 : i64} {
  func.func @_linear_kernel(%arg0: i32, %arg1: memref<8x1024xf32, #tpu.memory_space<vmem>>, %arg2: memref<1024x128xbf16, #tpu.memory_space<vmem>>, %arg3: memref<1x128xf32, #tpu.memory_space<vmem>>, %arg4: memref<8x128xf32, #tpu.memory_space<vmem>>) attributes {dimension_semantics = [#tpu.dimension_semantics<parallel>], iteration_bounds = array<i64: 1>, scalar_prefetch = 0 : i64, scratch_operands = 0 : i64, tpu.core_type = #tpu.core_type<tc>, window_params = [{transform_indices = @transform_0, window_bounds = array<i64: 8, 1024>}, {pipeline_mode = #tpu.pipeline_mode<synchronous>, transform_indices = @transform_1, window_bounds = array<i64: 1024, 128>}, {pipeline_mode = #tpu.pipeline_mode<synchronous>, transform_indices = @transform_2, window_bounds = array<i64: 1, 128>}, {transform_indices = @transform_3, window_bounds = array<i64: 8, 128>}]} {
    %c0 = arith.constant 0 : index
    %c0_0 = arith.constant 0 : index
    %0 = vector.load %arg1[%c0, %c0_0] : memref<8x1024xf32, #tpu.memory_space<vmem>>, vector<8x1024xf32>
    %1 = arith.truncf %0 : vector<8x1024xf32> to vector<8x1024xbf16>
    %c0_1 = arith.constant 0 : index
    %c0_2 = arith.constant 0 : index
    %2 = vector.load %arg2[%c0_1, %c0_2] : memref<1024x128xbf16, #tpu.memory_space<vmem>>, vector<1024x128xbf16>
    %cst = arith.constant dense<0.000000e+00> : vector<8x128xf32>
    %3 = tpu.matmul %1, %2, %cst {dimension_numbers = #tpu.dot_dimension_numbers<[1], [0], [0], [1], [0, 0, 1, 1], [], []>} : vector<8x1024xbf16>, vector<1024x128xbf16>, vector<8x128xf32> -> vector<8x128xf32>
    %c0_3 = arith.constant 0 : index
    %c0_4 = arith.constant 0 : index
    %4 = vector.load %arg3[%c0_3, %c0_4] : memref<1x128xf32, #tpu.memory_space<vmem>>, vector<1x128xf32>
    %5 = vector.broadcast %4 : vector<1x128xf32> to vector<8x128xf32>
    %6 = arith.addf %3, %5 : vector<8x128xf32>
    %c0_5 = arith.constant 0 : index
    %c0_6 = arith.constant 0 : index
    %7 = vector.load %arg4[%c0_5, %c0_6] : memref<8x128xf32, #tpu.memory_space<vmem>>, vector<8x128xf32>
    tpu.vector_store %arg4[%c0_5, %c0_6], %6 {strides = array<i32>} : memref<8x128xf32, #tpu.memory_space<vmem>>, vector<8x128xf32>,
    return
  }
  func.func @transform_0(%arg0: i32) -> (i32, i32) {
    %c0_i32 = arith.constant 0 : i32
    %c0_i32_0 = arith.constant 0 : i32
    return %arg0, %c0_i32 : i32, i32
  }
  func.func @transform_1(%arg0: i32) -> (i32, i32) {
    %c0_i32 = arith.constant 0 : i32
    %c0_i32_0 = arith.constant 0 : i32
    %c0_i32_1 = arith.constant 0 : i32
    return %c0_i32, %c0_i32_0 : i32, i32
  }
  func.func @transform_2(%arg0: i32) -> (i32, i32) {
    %c0_i32 = arith.constant 0 : i32
    %c0_i32_0 = arith.constant 0 : i32
    %c0_i32_1 = arith.constant 0 : i32
    return %c0_i32, %c0_i32_0 : i32, i32
  }
  func.func @transform_3(%arg0: i32) -> (i32, i32) {
    %c0_i32 = arith.constant 0 : i32
    %c0_i32_0 = arith.constant 0 : i32
    return %arg0, %c0_i32 : i32, i32
  }
}

</mosaic_0001>

<llo_original>
// kernel: tpu_custom_call.1
$region0: #{tpu_custom_call.1}
  #allocation0 [shape = 'u32[]', space=smem, size = 0x4, offset = 0x4, fixed_abs, tag = 'smem constant byte address 0x4 - core index']
  #allocation1 [shape = 'u32[144,128]{1,0:T(1,128)}', space=vmem, size = 0x12000, scoped, tag = 'internal scratch']
  %s0 = inlined_call_operand.hbm [shape: f32[2,1024], index: 0, kind: input, shape index: {}]
  %s1 = inlined_call_operand.hbm [shape: bf16[1024,128], index: 1, kind: input, shape index: {}]
  %s2 = inlined_call_operand.vmem [shape: f32[1,128], index: 2, kind: input, shape index: {}]
  %s3 = inlined_call_operand.hbm [shape: f32[2,128], index: 3, kind: output, shape index: {}]
  %s4 = sld [smem:[#allocation0]]
  $region30: #{tpu_custom_call.1} parent=0
    _
  %s6 = ssub.s32 1, %s4
  %s7 = scalar_select 0, %s6, %s4
  $region1: #{tpu_custom_call.1} parent=0
    #allocation2 [shape = 'u8[32768]{0}', space=vmem, size = 0x8000, scoped, tag = 'input window, operand 0, single buffered']
    #allocation3 [shape = 's32[1]{0}', space=sflag, size = 0x4, scoped, tag = 'scoped memory for tpu_custom_call.1']
    #allocation4 [shape = 's32[1]{0}', space=sflag, size = 0x4, scoped, tag = 'scoped memory for tpu_custom_call.1']
    #allocation5 [shape = 'u8[262144]{0}', space=vmem, size = 0x40000, scoped, tag = 'input window, operand 1, single buffered']
    #allocation6 [shape = 's32[1]{0}', space=sflag, size = 0x4, scoped, tag = 'scoped memory for tpu_custom_call.1']
    #allocation7 [shape = 'u8[4096]{0}', space=vmem, size = 0x1000, scoped, tag = 'output window, operand 0, single buffered']
    %8 = vsyncpa [#allocation3], 0
    %9 = vsyncpa [#allocation6], 0
    %10 = vsyncpa [#allocation4], 0
    // Predicated region
    $region2: #{tpu_custom_call.1} parent=1 // pred_check
      _
    $region3: #{tpu_custom_call.1} parent=1 // pred_check_branch
      %12 = sbr.rel (0) target = $region5
    $region4: #{tpu_custom_call.1} parent=1 // pred_region
      %s14 = ssub.s32 1024, 256
      %15 = vsyncadd [#allocation3], %s14
      %s16 = sshll.u32 [#allocation2], 4
      %s17 = int_to_ptr.vmem [resolvable:$true] %s16
      %22 = dma.hbm_to_vmem [thread:$0]  %s0, 256, %s17, [#allocation3], 256, 256, 16
    $region5: #{tpu_custom_call.1} parent=1 // pred_fallthru
      _
    // Predicated region
    $region6: #{tpu_custom_call.1} parent=1 // pred_check
      _
    $region7: #{tpu_custom_call.1} parent=1 // pred_check_branch
      %24 = sbr.rel (0) target = $region9
    $region8: #{tpu_custom_call.1} parent=1 // pred_region
      %s26 = ssub.s32 8192, 8192
      %27 = vsyncadd [#allocation6], %s26
      %s28 = sshll.u32 [#allocation5], 4
      %s29 = int_to_ptr.vmem [resolvable:$true] %s28
      %34 = dma.hbm_to_vmem [thread:$0]  %s1, 8192, %s29, [#allocation6], 64, 64, 4
    $region9: #{tpu_custom_call.1} parent=1 // pred_fallthru
      _
    // Predicated region
    $region10: #{tpu_custom_call.1} parent=1 // pred_check
      _
    $region11: #{tpu_custom_call.1} parent=1 // pred_check_branch
      %36 = sbr.rel (0) target = $region13
    $region12: #{tpu_custom_call.1} parent=1 // pred_region
      _
    $region13: #{tpu_custom_call.1} parent=1 // pred_fallthru
      _
    // Predicated region
    $region14: #{tpu_custom_call.1} parent=1 // pred_check
      _
    $region15: #{tpu_custom_call.1} parent=1 // pred_check_branch
      %38 = sbr.rel (0) target = $region17
    $region16: #{tpu_custom_call.1} parent=1 // pred_region
      %39 = dma.done [#allocation3], 1024
    $region17: #{tpu_custom_call.1} parent=1 // pred_fallthru
      _
    // Predicated region
    $region18: #{tpu_custom_call.1} parent=1 // pred_check
      _
    $region19: #{tpu_custom_call.1} parent=1 // pred_check_branch
      %41 = sbr.rel (0) target = $region21
    $region20: #{tpu_custom_call.1} parent=1 // pred_region
      %42 = dma.done [#allocation6], 8192
    $region21: #{tpu_custom_call.1} parent=1 // pred_fallthru
      _
    %v44 = vld [vmem:[#allocation2] sm:$0xff]
    %v45 = vld [vmem:[#allocation2 + $0x8] sm:$0xff]
    %v46 = vld [vmem:[#allocation2 + $0x10] sm:$0xff]
    %v47 = vld [vmem:[#allocation2 + $0x18] sm:$0xff]
    %v48 = vld [vmem:[#allocation2 + $0x20] sm:$0xff]
    %v49 = vld [vmem:[#allocation2 + $0x28] sm:$0xff]
    %v50 = vld [vmem:[#allocation2 + $0x30] sm:$0xff]
    %v51 = vld [vmem:[#allocation2 + $0x38] sm:$0xff]
    %v60 = vcombine.low %v44, %v46
    %v61 = vcombine.high %v44, %v46
    %v62 = vcombine.low %v48, %v50
    %v63 = vcombine.high %v48, %v50
    %v65 = vunpack.c.l.s4 1983009808
    %v66 = vunpack.c.0.s8 %v65
    %v67 = vlaneseq
    %v68 = vshrl.u32 %v67, 7
    %v69 = vsub.s32 %v66, %v68
    %v70 = vrot.slane %v60, %v69
    %v72 = vunpack.c.l.s4 1983009808
    %v73 = vunpack.c.0.s8 %v72
    %v74 = vlaneseq
    %v75 = vshrl.u32 %v74, 7
    %v76 = vsub.s32 %v73, %v75
    %v77 = vrot.slane %v61, %v76
    %v79 = vunpack.c.l.s4 1983009808
    %v80 = vunpack.c.0.s8 %v79
    %v81 = vlaneseq
    %v82 = vshrl.u32 %v81, 7
    %v83 = vsub.s32 %v80, %v82
    %v84 = vrot.slane %v62, %v83
    %v86 = vunpack.c.l.s4 1983009808
    %v87 = vunpack.c.0.s8 %v86
    %v88 = vlaneseq
    %v89 = vshrl.u32 %v88, 7
    %v90 = vsub.s32 %v87, %v89
    %v91 = vrot.slane %v63, %v90
    %v92 = vcombine.low %v70, %v84
    %v93 = vcombine.high %v70, %v84
    %v94 = vcombine.low %v77, %v91
    %v95 = vcombine.high %v77, %v91
    %v96 = vcombine.low %v45, %v47
    %v97 = vcombine.high %v45, %v47
    %v98 = vcombine.low %v49, %v51
    %v99 = vcombine.high %v49, %v51
    %v101 = vunpack.c.l.s4 1983009808
    %v102 = vunpack.c.0.s8 %v101
    %v103 = vlaneseq
    %v104 = vshrl.u32 %v103, 7
    %v105 = vsub.s32 %v102, %v104
    %v106 = vrot.slane %v96, %v105
    %v108 = vunpack.c.l.s4 1983009808
    %v109 = vunpack.c.0.s8 %v108
    %v110 = vlaneseq
    %v111 = vshrl.u32 %v110, 7
    %v112 = vsub.s32 %v109, %v111
    %v113 = vrot.slane %v97, %v112
    %v115 = vunpack.c.l.s4 1983009808
    %v116 = vunpack.c.0.s8 %v115
    %v117 = vlaneseq
    %v118 = vshrl.u32 %v117, 7
    %v119 = vsub.s32 %v116, %v118
    %v120 = vrot.slane %v98, %v119
    %v122 = vunpack.c.l.s4 1983009808
    %v123 = vunpack.c.0.s8 %v122
    %v124 = vlaneseq
    %v125 = vshrl.u32 %v124, 7
    %v126 = vsub.s32 %v123, %v125
    %v127 = vrot.slane %v99, %v126
    %v128 = vcombine.low %v106, %v120
    %v129 = vcombine.high %v106, %v120
    %v130 = vcombine.low %v113, %v127
    %v131 = vcombine.high %v113, %v127
    %v140 = vpack.c.bf16 %v92, %v92
    %v141 = vpack.c.bf16 %v93, %v93
    %v142 = vpack.c.bf16 %v94, %v94
    %v143 = vpack.c.bf16 %v95, %v95
    %v144 = vpack.c.bf16 %v128, %v128
    %v145 = vpack.c.bf16 %v129, %v129
    %v146 = vpack.c.bf16 %v130, %v130
    %v147 = vpack.c.bf16 %v131, %v131
    %v148 = vld [vmem:[#allocation5] sm:$0xf]
    %v149 = vld [vmem:[#allocation5 + $0x4] sm:$0xf]
    %v150 = vld [vmem:[#allocation5 + $0x8] sm:$0xf]
    %v151 = vld [vmem:[#allocation5 + $0xc] sm:$0xf]
    %v152 = vld [vmem:[#allocation5 + $0x10] sm:$0xf]
    %v153 = vld [vmem:[#allocation5 + $0x14] sm:$0xf]
    %v154 = vld [vmem:[#allocation5 + $0x18] sm:$0xf]
    %v155 = vld [vmem:[#allocation5 + $0x1c] sm:$0xf]
    %v156 = vld [vmem:[#allocation5 + $0x20] sm:$0xf]
    %v157 = vld [vmem:[#allocation5 + $0x24] sm:$0xf]
    %v158 = vld [vmem:[#allocation5 + $0x28] sm:$0xf]
    %v159 = vld [vmem:[#allocation5 + $0x2c] sm:$0xf]
    %v160 = vld [vmem:[#allocation5 + $0x30] sm:$0xf]
    %v161 = vld [vmem:[#allocation5 + $0x34] sm:$0xf]
    %v162 = vld [vmem:[#allocation5 + $0x38] sm:$0xf]
    %v163 = vld [vmem:[#allocation5 + $0x3c] sm:$0xf]
    %v164 = vld [vmem:[#allocation5 + $0x40] sm:$0xf]
    %v165 = vld [vmem:[#allocation5 + $0x44] sm:$0xf]
    %v166 = vld [vmem:[#allocation5 + $0x48] sm:$0xf]
    %v167 = vld [vmem:[#allocation5 + $0x4c] sm:$0xf]
    %v168 = vld [vmem:[#allocation5 + $0x50] sm:$0xf]
    %v169 = vld [vmem:[#allocation5 + $0x54] sm:$0xf]
    %v170 = vld [vmem:[#allocation5 + $0x58] sm:$0xf]
    %v171 = vld [vmem:[#allocation5 + $0x5c] sm:$0xf]
    %v172 = vld [vmem:[#allocation5 + $0x60] sm:$0xf]
    %v173 = vld [vmem:[#allocation5 + $0x64] sm:$0xf]
    %v174 = vld [vmem:[#allocation5 + $0x68] sm:$0xf]
    %v175 = vld [vmem:[#allocation5 + $0x6c] sm:$0xf]
    %v176 = vld [vmem:[#allocation5 + $0x70] sm:$0xf]
    %v177 = vld [vmem:[#allocation5 + $0x74] sm:$0xf]
    %v178 = vld [vmem:[#allocation5 + $0x78] sm:$0xf]
    %v179 = vld [vmem:[#allocation5 + $0x7c] sm:$0xf]
    %v180 = vld [vmem:[#allocation5 + $0x80] sm:$0xf]
    %v181 = vld [vmem:[#allocation5 + $0x84] sm:$0xf]
    %v182 = vld [vmem:[#allocation5 + $0x88] sm:$0xf]
    %v183 = vld [vmem:[#allocation5 + $0x8c] sm:$0xf]
    %v184 = vld [vmem:[#allocation5 + $0x90] sm:$0xf]
    %v185 = vld [vmem:[#allocation5 + $0x94] sm:$0xf]
    %v186 = vld [vmem:[#allocation5 + $0x98] sm:$0xf]
    %v187 = vld [vmem:[#allocation5 + $0x9c] sm:$0xf]
    %v188 = vld [vmem:[#allocation5 + $0xa0] sm:$0xf]
    %v189 = vld [vmem:[#allocation5 + $0xa4] sm:$0xf]
    %v190 = vld [vmem:[#allocation5 + $0xa8] sm:$0xf]
    %v191 = vld [vmem:[#allocation5 + $0xac] sm:$0xf]
    %v192 = vld [vmem:[#allocation5 + $0xb0] sm:$0xf]
    %v193 = vld [vmem:[#allocation5 + $0xb4] sm:$0xf]
    %v194 = vld [vmem:[#allocation5 + $0xb8] sm:$0xf]
    %v195 = vld [vmem:[#allocation5 + $0xbc] sm:$0xf]
    %v196 = vld [vmem:[#allocation5 + $0xc0] sm:$0xf]
    %v197 = vld [vmem:[#allocation5 + $0xc4] sm:$0xf]
    %v198 = vld [vmem:[#allocation5 + $0xc8] sm:$0xf]
    %v199 = vld [vmem:[#allocation5 + $0xcc] sm:$0xf]
    %v200 = vld [vmem:[#allocation5 + $0xd0] sm:$0xf]
    %v201 = vld [vmem:[#allocation5 + $0xd4] sm:$0xf]
    %v202 = vld [vmem:[#allocation5 + $0xd8] sm:$0xf]
    %v203 = vld [vmem:[#allocation5 + $0xdc] sm:$0xf]
    %v204 = vld [vmem:[#allocation5 + $0xe0] sm:$0xf]
    %v205 = vld [vmem:[#allocation5 + $0xe4] sm:$0xf]
    %v206 = vld [vmem:[#allocation5 + $0xe8] sm:$0xf]
    %v207 = vld [vmem:[#allocation5 + $0xec] sm:$0xf]
    %v208 = vld [vmem:[#allocation5 + $0xf0] sm:$0xf]
    %v209 = vld [vmem:[#allocation5 + $0xf4] sm:$0xf]
    %v210 = vld [vmem:[#allocation5 + $0xf8] sm:$0xf]
    %v211 = vld [vmem:[#allocation5 + $0xfc] sm:$0xf]
    %v212 = vld [vmem:[#allocation5 + $0x100] sm:$0xf]
    %v213 = vld [vmem:[#allocation5 + $0x104] sm:$0xf]
    %v214 = vld [vmem:[#allocation5 + $0x108] sm:$0xf]
    %v215 = vld [vmem:[#allocation5 + $0x10c] sm:$0xf]
    %v216 = vld [vmem:[#allocation5 + $0x110] sm:$0xf]
    %v217 = vld [vmem:[#allocation5 + $0x114] sm:$0xf]
    %v218 = vld [vmem:[#allocation5 + $0x118] sm:$0xf]
    %v219 = vld [vmem:[#allocation5 + $0x11c] sm:$0xf]
    %v220 = vld [vmem:[#allocation5 + $0x120] sm:$0xf]
    %v221 = vld [vmem:[#allocation5 + $0x124] sm:$0xf]
    %v222 = vld [vmem:[#allocation5 + $0x128] sm:$0xf]
    %v223 = vld [vmem:[#allocation5 + $0x12c] sm:$0xf]
    %v224 = vld [vmem:[#allocation5 + $0x130] sm:$0xf]
    %v225 = vld [vmem:[#allocation5 + $0x134] sm:$0xf]
    %v226 = vld [vmem:[#allocation5 + $0x138] sm:$0xf]
    %v227 = vld [vmem:[#allocation5 + $0x13c] sm:$0xf]
    %v228 = vld [vmem:[#allocation5 + $0x140] sm:$0xf]
    %v229 = vld [vmem:[#allocation5 + $0x144] sm:$0xf]
    %v230 = vld [vmem:[#allocation5 + $0x148] sm:$0xf]
    %v231 = vld [vmem:[#allocation5 + $0x14c] sm:$0xf]
    %v232 = vld [vmem:[#allocation5 + $0x150] sm:$0xf]
    %v233 = vld [vmem:[#allocation5 + $0x154] sm:$0xf]
    %v234 = vld [vmem:[#allocation5 + $0x158] sm:$0xf]
    %v235 = vld [vmem:[#allocation5 + $0x15c] sm:$0xf]
    %v236 = vld [vmem:[#allocation5 + $0x160] sm:$0xf]
    %v237 = vld [vmem:[#allocation5 + $0x164] sm:$0xf]
    %v238 = vld [vmem:[#allocation5 + $0x168] sm:$0xf]
    %v239 = vld [vmem:[#allocation5 + $0x16c] sm:$0xf]
    %v240 = vld [vmem:[#allocation5 + $0x170] sm:$0xf]
    %v241 = vld [vmem:[#allocation5 + $0x174] sm:$0xf]
    %v242 = vld [vmem:[#allocation5 + $0x178] sm:$0xf]
    %v243 = vld [vmem:[#allocation5 + $0x17c] sm:$0xf]
    %v244 = vld [vmem:[#allocation5 + $0x180] sm:$0xf]
    %v245 = vld [vmem:[#allocation5 + $0x184] sm:$0xf]
    %v246 = vld [vmem:[#allocation5 + $0x188] sm:$0xf]
    %v247 = vld [vmem:[#allocation5 + $0x18c] sm:$0xf]
    %v248 = vld [vmem:[#allocation5 + $0x190] sm:$0xf]
    %v249 = vld [vmem:[#allocation5 + $0x194] sm:$0xf]
    %v250 = vld [vmem:[#allocation5 + $0x198] sm:$0xf]
    %v251 = vld [vmem:[#allocation5 + $0x19c] sm:$0xf]
    %v252 = vld [vmem:[#allocation5 + $0x1a0] sm:$0xf]
    %v253 = vld [vmem:[#allocation5 + $0x1a4] sm:$0xf]
    %v254 = vld [vmem:[#allocation5 + $0x1a8] sm:$0xf]
    %v255 = vld [vmem:[#allocation5 + $0x1ac] sm:$0xf]
    %v256 = vld [vmem:[#allocation5 + $0x1b0] sm:$0xf]
    %v257 = vld [vmem:[#allocation5 + $0x1b4] sm:$0xf]
    %v258 = vld [vmem:[#allocation5 + $0x1b8] sm:$0xf]
    %v259 = vld [vmem:[#allocation5 + $0x1bc] sm:$0xf]
    %v260 = vld [vmem:[#allocation5 + $0x1c0] sm:$0xf]
    %v261 = vld [vmem:[#allocation5 + $0x1c4] sm:$0xf]
    %v262 = vld [vmem:[#allocation5 + $0x1c8] sm:$0xf]
    %v263 = vld [vmem:[#allocation5 + $0x1cc] sm:$0xf]
    %v264 = vld [vmem:[#allocation5 + $0x1d0] sm:$0xf]
    %v265 = vld [vmem:[#allocation5 + $0x1d4] sm:$0xf]
    %v266 = vld [vmem:[#allocation5 + $0x1d8] sm:$0xf]
    %v267 = vld [vmem:[#allocation5 + $0x1dc] sm:$0xf]
    %v268 = vld [vmem:[#allocation5 + $0x1e0] sm:$0xf]
    %v269 = vld [vmem:[#allocation5 + $0x1e4] sm:$0xf]
    %v270 = vld [vmem:[#allocation5 + $0x1e8] sm:$0xf]
    %v271 = vld [vmem:[#allocation5 + $0x1ec] sm:$0xf]
    %v272 = vld [vmem:[#allocation5 + $0x1f0] sm:$0xf]
    %v273 = vld [vmem:[#allocation5 + $0x1f4] sm:$0xf]
    %v274 = vld [vmem:[#allocation5 + $0x1f8] sm:$0xf]
    %v275 = vld [vmem:[#allocation5 + $0x1fc] sm:$0xf]
    %v276 = vld [vmem:[%s2] sm:$0x1]
    %v278 = vlaneseq
    %v279 = vshrl.u32 %v278, 7
    %v280 = vsub.s32 0, %v279
    %v281 = vrot.slane %v276, %v280
    %v411 = vunpack.c.l.b16 %v148
    %v412 = vunpack.c.l.b16 %v149
    %v413 = vunpack.c.l.b16 %v150
    %v414 = vunpack.c.l.b16 %v151
    %v415 = vunpack.c.l.b16 %v152
    %v416 = vunpack.c.l.b16 %v153
    %v417 = vunpack.c.l.b16 %v154
    %v418 = vunpack.c.l.b16 %v155
    %v419 = vunpack.c.l.b16 %v156
    %v420 = vunpack.c.l.b16 %v157
    %v421 = vunpack.c.l.b16 %v158
    %v422 = vunpack.c.l.b16 %v159
    %v423 = vunpack.c.l.b16 %v160
    %v424 = vunpack.c.l.b16 %v161
    %v425 = vunpack.c.l.b16 %v162
    %v426 = vunpack.c.l.b16 %v163
    %v427 = vunpack.c.l.b16 %v164
    %v428 = vunpack.c.l.b16 %v165
    %v429 = vunpack.c.l.b16 %v166
    %v430 = vunpack.c.l.b16 %v167
    %v431 = vunpack.c.l.b16 %v168
    %v432 = vunpack.c.l.b16 %v169
    %v433 = vunpack.c.l.b16 %v170
    %v434 = vunpack.c.l.b16 %v171
    %v435 = vunpack.c.l.b16 %v172
    %v436 = vunpack.c.l.b16 %v173
    %v437 = vunpack.c.l.b16 %v174
    %v438 = vunpack.c.l.b16 %v175
    %v439 = vunpack.c.l.b16 %v176
    %v440 = vunpack.c.l.b16 %v177
    %v441 = vunpack.c.l.b16 %v178
    %v442 = vunpack.c.l.b16 %v179
    %v443 = vunpack.c.l.b16 %v180
    %v444 = vunpack.c.l.b16 %v181
    %v445 = vunpack.c.l.b16 %v182
    %v446 = vunpack.c.l.b16 %v183
    %v447 = vunpack.c.l.b16 %v184
    %v448 = vunpack.c.l.b16 %v185
    %v449 = vunpack.c.l.b16 %v186
    %v450 = vunpack.c.l.b16 %v187
    %v451 = vunpack.c.l.b16 %v188
    %v452 = vunpack.c.l.b16 %v189
    %v453 = vunpack.c.l.b16 %v190
    %v454 = vunpack.c.l.b16 %v191
    %v455 = vunpack.c.l.b16 %v192
    %v456 = vunpack.c.l.b16 %v193
    %v457 = vunpack.c.l.b16 %v194
    %v458 = vunpack.c.l.b16 %v195
    %v459 = vunpack.c.l.b16 %v196
    %v460 = vunpack.c.l.b16 %v197
    %v461 = vunpack.c.l.b16 %v198
    %v462 = vunpack.c.l.b16 %v199
    %v463 = vunpack.c.l.b16 %v200
    %v464 = vunpack.c.l.b16 %v201
    %v465 = vunpack.c.l.b16 %v202
    %v466 = vunpack.c.l.b16 %v203
    %v467 = vunpack.c.l.b16 %v204
    %v468 = vunpack.c.l.b16 %v205
    %v469 = vunpack.c.l.b16 %v206
    %v470 = vunpack.c.l.b16 %v207
    %v471 = vunpack.c.l.b16 %v208
    %v472 = vunpack.c.l.b16 %v209
    %v473 = vunpack.c.l.b16 %v210
    %v474 = vunpack.c.l.b16 %v211
    %v475 = vunpack.c.l.b16 %v212
    %v476 = vunpack.c.l.b16 %v213
    %v477 = vunpack.c.l.b16 %v214
    %v478 = vunpack.c.l.b16 %v215
    %v479 = vunpack.c.l.b16 %v216
    %v480 = vunpack.c.l.b16 %v217
    %v481 = vunpack.c.l.b16 %v218
    %v482 = vunpack.c.l.b16 %v219
    %v483 = vunpack.c.l.b16 %v220
    %v484 = vunpack.c.l.b16 %v221
    %v485 = vunpack.c.l.b16 %v222
    %v486 = vunpack.c.l.b16 %v223
    %v487 = vunpack.c.l.b16 %v224
    %v488 = vunpack.c.l.b16 %v225
    %v489 = vunpack.c.l.b16 %v226
    %v490 = vunpack.c.l.b16 %v227
    %v491 = vunpack.c.l.b16 %v228
    %v492 = vunpack.c.l.b16 %v229
    %v493 = vunpack.c.l.b16 %v230
    %v494 = vunpack.c.l.b16 %v231
    %v495 = vunpack.c.l.b16 %v232
    %v496 = vunpack.c.l.b16 %v233
    %v497 = vunpack.c.l.b16 %v234
    %v498 = vunpack.c.l.b16 %v235
    %v499 = vunpack.c.l.b16 %v236
    %v500 = vunpack.c.l.b16 %v237
    %v501 = vunpack.c.l.b16 %v238
    %v502 = vunpack.c.l.b16 %v239
    %v503 = vunpack.c.l.b16 %v240
    %v504 = vunpack.c.l.b16 %v241
    %v505 = vunpack.c.l.b16 %v242
    %v506 = vunpack.c.l.b16 %v243
    %v507 = vunpack.c.l.b16 %v244
    %v508 = vunpack.c.l.b16 %v245
    %v509 = vunpack.c.l.b16 %v246
    %v510 = vunpack.c.l.b16 %v247
    %v511 = vunpack.c.l.b16 %v248
    %v512 = vunpack.c.l.b16 %v249
    %v513 = vunpack.c.l.b16 %v250
    %v514 = vunpack.c.l.b16 %v251
    %v515 = vunpack.c.l.b16 %v252
    %v516 = vunpack.c.l.b16 %v253
    %v517 = vunpack.c.l.b16 %v254
    %v518 = vunpack.c.l.b16 %v255
    %v519 = vunpack.c.l.b16 %v256
    %v520 = vunpack.c.l.b16 %v257
    %v521 = vunpack.c.l.b16 %v258
    %v522 = vunpack.c.l.b16 %v259
    %v523 = vunpack.c.l.b16 %v260
    %v524 = vunpack.c.l.b16 %v261
    %v525 = vunpack.c.l.b16 %v262
    %v526 = vunpack.c.l.b16 %v263
    %v527 = vunpack.c.l.b16 %v264
    %v528 = vunpack.c.l.b16 %v265
    %v529 = vunpack.c.l.b16 %v266
    %v530 = vunpack.c.l.b16 %v267
    %v531 = vunpack.c.l.b16 %v268
    %v532 = vunpack.c.l.b16 %v269
    %v533 = vunpack.c.l.b16 %v270
    %v534 = vunpack.c.l.b16 %v271
    %v535 = vunpack.c.l.b16 %v272
    %v536 = vunpack.c.l.b16 %v273
    %v537 = vunpack.c.l.b16 %v274
    %v538 = vunpack.c.l.b16 %v275
    %v539 = vpack.c.b16 %v412, %v411
    %v540 = vpack.c.b16 %v414, %v413
    %v541 = vpack.c.b16 %v416, %v415
    %v542 = vpack.c.b16 %v418, %v417
    %v543 = vpack.c.b16 %v420, %v419
    %v544 = vpack.c.b16 %v422, %v421
    %v545 = vpack.c.b16 %v424, %v423
    %v546 = vpack.c.b16 %v426, %v425
    %v547 = vpack.c.b16 %v428, %v427
    %v548 = vpack.c.b16 %v430, %v429
    %v549 = vpack.c.b16 %v432, %v431
    %v550 = vpack.c.b16 %v434, %v433
    %v551 = vpack.c.b16 %v436, %v435
    %v552 = vpack.c.b16 %v438, %v437
    %v553 = vpack.c.b16 %v440, %v439
    %v554 = vpack.c.b16 %v442, %v441
    %v555 = vpack.c.b16 %v444, %v443
    %v556 = vpack.c.b16 %v446, %v445
    %v557 = vpack.c.b16 %v448, %v447
    %v558 = vpack.c.b16 %v450, %v449
    %v559 = vpack.c.b16 %v452, %v451
    %v560 = vpack.c.b16 %v454, %v453
    %v561 = vpack.c.b16 %v456, %v455
    %v562 = vpack.c.b16 %v458, %v457
    %v563 = vpack.c.b16 %v460, %v459
    %v564 = vpack.c.b16 %v462, %v461
    %v565 = vpack.c.b16 %v464, %v463
    %v566 = vpack.c.b16 %v466, %v465
    %v567 = vpack.c.b16 %v468, %v467
    %v568 = vpack.c.b16 %v470, %v469
    %v569 = vpack.c.b16 %v472, %v471
    %v570 = vpack.c.b16 %v474, %v473
    %v571 = vpack.c.b16 %v476, %v475
    %v572 = vpack.c.b16 %v478, %v477
    %v573 = vpack.c.b16 %v480, %v479
    %v574 = vpack.c.b16 %v482, %v481
    %v575 = vpack.c.b16 %v484, %v483
    %v576 = vpack.c.b16 %v486, %v485
    %v577 = vpack.c.b16 %v488, %v487
    %v578 = vpack.c.b16 %v490, %v489
    %v579 = vpack.c.b16 %v492, %v491
    %v580 = vpack.c.b16 %v494, %v493
    %v581 = vpack.c.b16 %v496, %v495
    %v582 = vpack.c.b16 %v498, %v497
    %v583 = vpack.c.b16 %v500, %v499
    %v584 = vpack.c.b16 %v502, %v501
    %v585 = vpack.c.b16 %v504, %v503
    %v586 = vpack.c.b16 %v506, %v505
    %v587 = vpack.c.b16 %v508, %v507
    %v588 = vpack.c.b16 %v510, %v509
    %v589 = vpack.c.b16 %v512, %v511
    %v590 = vpack.c.b16 %v514, %v513
    %v591 = vpack.c.b16 %v516, %v515
    %v592 = vpack.c.b16 %v518, %v517
    %v593 = vpack.c.b16 %v520, %v519
    %v594 = vpack.c.b16 %v522, %v521
    %v595 = vpack.c.b16 %v524, %v523
    %v596 = vpack.c.b16 %v526, %v525
    %v597 = vpack.c.b16 %v528, %v527
    %v598 = vpack.c.b16 %v530, %v529
    %v599 = vpack.c.b16 %v532, %v531
    %v600 = vpack.c.b16 %v534, %v533
    %v601 = vpack.c.b16 %v536, %v535
    %v602 = vpack.c.b16 %v538, %v537
    %667 = vmatprep.subr.bf16.mxu0 0
    %668 = vmatpush1.bf16.msra.mxu0 %v539
    %669 = vmatprep.subr.bf16.mxu0 0
    %670 = vmatpush1.bf16.msra.mxu0 %v540
    %671 = vmatprep.subr.bf16.mxu0 0
    %672 = vmatpush1.bf16.msra.mxu0 %v541
    %673 = vmatprep.subr.bf16.mxu0 0
    %674 = vmatpush1.bf16.msra.mxu0 %v542
    %675 = vmatprep.subr.bf16.mxu0 0
    %676 = vmatpush1.bf16.msra.mxu0 %v543
    %677 = vmatprep.subr.bf16.mxu0 0
    %678 = vmatpush1.bf16.msra.mxu0 %v544
    %679 = vmatprep.subr.bf16.mxu0 0
    %680 = vmatpush1.bf16.msra.mxu0 %v545
    %681 = vmatprep.subr.bf16.mxu0 0
    %682 = vmatpush1.bf16.msra.mxu0 %v546
    %683 = vmatprep.subr.bf16.mxu0 0
    %684 = vmatpush1.bf16.msra.mxu0 %v547
    %685 = vmatprep.subr.bf16.mxu0 0
    %686 = vmatpush1.bf16.msra.mxu0 %v548
    %687 = vmatprep.subr.bf16.mxu0 0
    %688 = vmatpush1.bf16.msra.mxu0 %v549
    %689 = vmatprep.subr.bf16.mxu0 0
    %690 = vmatpush1.bf16.msra.mxu0 %v550
    %691 = vmatprep.subr.bf16.mxu0 0
    %692 = vmatpush1.bf16.msra.mxu0 %v551
    %693 = vmatprep.subr.bf16.mxu0 0
    %694 = vmatpush1.bf16.msra.mxu0 %v552
    %695 = vmatprep.subr.bf16.mxu0 0
    %696 = vmatpush1.bf16.msra.mxu0 %v553
    %697 = vmatprep.subr.bf16.mxu0 0
    %698 = vmatpush1.bf16.msra.mxu0 %v554
    %699 = vmatprep.mubr.bf16.mxu0 %v141
    %700 = vmatmul.mubr.bf16.gmra.mrb[0].mxu0 %v140
    %v701 = vpop.f32.mrb[0].mxu0
    %v702 = vadd.f32 %v281, %v701
    %v703 = vpop.f32.mrb[0].mxu0
    %v704 = vpop.f32.mrb[0].mxu0
    %v705 = vpop.f32.mrb[0].mxu0
    %706 = vdwg.mxu0
    %707 = vmatprep.subr.bf16.mxu0 0
    %708 = vmatpush1.bf16.msra.mxu0 %v555
    %709 = vmatprep.subr.bf16.mxu0 0
    %710 = vmatpush1.bf16.msra.mxu0 %v556
    %711 = vmatprep.subr.bf16.mxu0 0
    %712 = vmatpush1.bf16.msra.mxu0 %v557
    %713 = vmatprep.subr.bf16.mxu0 0
    %714 = vmatpush1.bf16.msra.mxu0 %v558
    %715 = vmatprep.subr.bf16.mxu0 0
    %716 = vmatpush1.bf16.msra.mxu0 %v559
    %717 = vmatprep.subr.bf16.mxu0 0
    %718 = vmatpush1.bf16.msra.mxu0 %v560
    %719 = vmatprep.subr.bf16.mxu0 0
    %720 = vmatpush1.bf16.msra.mxu0 %v561
    %721 = vmatprep.subr.bf16.mxu0 0
    %722 = vmatpush1.bf16.msra.mxu0 %v562
    %723 = vmatprep.subr.bf16.mxu0 0
    %724 = vmatpush1.bf16.msra.mxu0 %v563
    %725 = vmatprep.subr.bf16.mxu0 0
    %726 = vmatpush1.bf16.msra.mxu0 %v564
    %727 = vmatprep.subr.bf16.mxu0 0
    %728 = vmatpush1.bf16.msra.mxu0 %v565
    %729 = vmatprep.subr.bf16.mxu0 0
    %730 = vmatpush1.bf16.msra.mxu0 %v566
    %731 = vmatprep.subr.bf16.mxu0 0
    %732 = vmatpush1.bf16.msra.mxu0 %v567
    %733 = vmatprep.subr.bf16.mxu0 0
    %734 = vmatpush1.bf16.msra.mxu0 %v568
    %735 = vmatprep.subr.bf16.mxu0 0
    %736 = vmatpush1.bf16.msra.mxu0 %v569
    %737 = vmatprep.subr.bf16.mxu0 0
    %738 = vmatpush1.bf16.msra.mxu0 %v570
    %739 = vmatprep.mubr.bf16.mxu0 %v143
    %740 = vmatmul.mubr.bf16.gmra.mrb[0].mxu0 %v142
    %v741 = vpop.f32.mrb[0].mxu0
    %v742 = vadd.f32 %v702, %v741
    %v743 = vpop.f32.mrb[0].mxu0
    %v744 = vpop.f32.mrb[0].mxu0
    %v745 = vpop.f32.mrb[0].mxu0
    %746 = vdwg.mxu0
    %747 = vmatprep.subr.bf16.mxu0 0
    %748 = vmatpush1.bf16.msra.mxu0 %v571
    %749 = vmatprep.subr.bf16.mxu0 0
    %750 = vmatpush1.bf16.msra.mxu0 %v572
    %751 = vmatprep.subr.bf16.mxu0 0
    %752 = vmatpush1.bf16.msra.mxu0 %v573
    %753 = vmatprep.subr.bf16.mxu0 0
    %754 = vmatpush1.bf16.msra.mxu0 %v574
    %755 = vmatprep.subr.bf16.mxu0 0
    %756 = vmatpush1.bf16.msra.mxu0 %v575
    %757 = vmatprep.subr.bf16.mxu0 0
    %758 = vmatpush1.bf16.msra.mxu0 %v576
    %759 = vmatprep.subr.bf16.mxu0 0
    %760 = vmatpush1.bf16.msra.mxu0 %v577
    %761 = vmatprep.subr.bf16.mxu0 0
    %762 = vmatpush1.bf16.msra.mxu0 %v578
    %763 = vmatprep.subr.bf16.mxu0 0
    %764 = vmatpush1.bf16.msra.mxu0 %v579
    %765 = vmatprep.subr.bf16.mxu0 0
    %766 = vmatpush1.bf16.msra.mxu0 %v580
    %767 = vmatprep.subr.bf16.mxu0 0
    %768 = vmatpush1.bf16.msra.mxu0 %v581
    %769 = vmatprep.subr.bf16.mxu0 0
    %770 = vmatpush1.bf16.msra.mxu0 %v582
    %771 = vmatprep.subr.bf16.mxu0 0
    %772 = vmatpush1.bf16.msra.mxu0 %v583
    %773 = vmatprep.subr.bf16.mxu0 0
    %774 = vmatpush1.bf16.msra.mxu0 %v584
    %775 = vmatprep.subr.bf16.mxu0 0
    %776 = vmatpush1.bf16.msra.mxu0 %v585
    %777 = vmatprep.subr.bf16.mxu0 0
    %778 = vmatpush1.bf16.msra.mxu0 %v586
    %779 = vmatprep.mubr.bf16.mxu0 %v145
    %780 = vmatmul.mubr.bf16.gmra.mrb[0].mxu0 %v144
    %v781 = vpop.f32.mrb[0].mxu0
    %v782 = vadd.f32 %v742, %v781
    %v783 = vpop.f32.mrb[0].mxu0
    %v784 = vpop.f32.mrb[0].mxu0
    %v785 = vpop.f32.mrb[0].mxu0
    %786 = vdwg.mxu0
    %787 = vmatprep.subr.bf16.mxu0 0
    %788 = vmatpush1.bf16.msra.mxu0 %v587
    %789 = vmatprep.subr.bf16.mxu0 0
    %790 = vmatpush1.bf16.msra.mxu0 %v588
    %791 = vmatprep.subr.bf16.mxu0 0
    %792 = vmatpush1.bf16.msra.mxu0 %v589
    %793 = vmatprep.subr.bf16.mxu0 0
    %794 = vmatpush1.bf16.msra.mxu0 %v590
    %795 = vmatprep.subr.bf16.mxu0 0
    %796 = vmatpush1.bf16.msra.mxu0 %v591
    %797 = vmatprep.subr.bf16.mxu0 0
    %798 = vmatpush1.bf16.msra.mxu0 %v592
    %799 = vmatprep.subr.bf16.mxu0 0
    %800 = vmatpush1.bf16.msra.mxu0 %v593
    %801 = vmatprep.subr.bf16.mxu0 0
    %802 = vmatpush1.bf16.msra.mxu0 %v594
    %803 = vmatprep.subr.bf16.mxu0 0
    %804 = vmatpush1.bf16.msra.mxu0 %v595
    %805 = vmatprep.subr.bf16.mxu0 0
    %806 = vmatpush1.bf16.msra.mxu0 %v596
    %807 = vmatprep.subr.bf16.mxu0 0
    %808 = vmatpush1.bf16.msra.mxu0 %v597
    %809 = vmatprep.subr.bf16.mxu0 0
    %810 = vmatpush1.bf16.msra.mxu0 %v598
    %811 = vmatprep.subr.bf16.mxu0 0
    %812 = vmatpush1.bf16.msra.mxu0 %v599
    %813 = vmatprep.subr.bf16.mxu0 0
    %814 = vmatpush1.bf16.msra.mxu0 %v600
    %815 = vmatprep.subr.bf16.mxu0 0
    %816 = vmatpush1.bf16.msra.mxu0 %v601
    %817 = vmatprep.subr.bf16.mxu0 0
    %818 = vmatpush1.bf16.msra.mxu0 %v602
    %819 = vmatprep.mubr.bf16.mxu0 %v147
    %820 = vmatmul.mubr.bf16.gmra.mrb[0].mxu0 %v146
    %v821 = vpop.f32.mrb[0].mxu0
    %v822 = vadd.f32 %v782, %v821
    %v823 = vpop.f32.mrb[0].mxu0
    %v824 = vpop.f32.mrb[0].mxu0
    %v825 = vpop.f32.mrb[0].mxu0
    %826 = vdwg.mxu0
    %827 = vst [vmem:[#allocation7] sm:$0xff] %v822
    // Predicated region
    $region22: #{tpu_custom_call.1} parent=1 // pred_check
      _
    $region23: #{tpu_custom_call.1} parent=1 // pred_check_branch
      %829 = sbr.rel (0) target = $region25
    $region24: #{tpu_custom_call.1} parent=1 // pred_region
      %s831 = ssub.s32 128, 32
      %832 = vsyncadd [#allocation4], %s831
      %s833 = sshll.u32 [#allocation7], 4
      %s834 = int_to_ptr.vmem [resolvable:$true] %s833
      %839 = dma.vmem_to_hbm [thread:$0]  %s834, 32, %s3, [#allocation4], 32, 32, 2
    $region25: #{tpu_custom_call.1} parent=1 // pred_fallthru
      _
    // Predicated region
    $region26: #{tpu_custom_call.1} parent=1 // pred_check
      _
    $region27: #{tpu_custom_call.1} parent=1 // pred_check_branch
      %841 = sbr.rel (0) target = $region29
    $region28: #{tpu_custom_call.1} parent=1 // pred_region
      %842 = dma.done [#allocation4], 128
    $region29: #{tpu_custom_call.1} parent=1 // pred_fallthru
      _
    %843 = vsyncpa [#allocation3], 1
    %844 = vsyncpa [#allocation6], 1
    %845 = vsyncpa [#allocation4], 1

</llo_original>
